<compile_context>
chip_gen: v5e
topology: v5e:2x2
jax: 0.10.0
libtpu: 0.0.40
codegen_flags: <defaults>
</compile_context>

<pallas_src>
import functools

import jax
import jax.numpy as jnp
from jax.experimental import pallas as pl
from jax.experimental.pallas import tpu as pltpu

BN_EPS = 1e-5
LEAKY_SLOPE = 0.01  # PyTorch nn.LeakyReLU default


def _conv_stats_kernel(p_ref, w_ref, y_ref, sum_ref, sq_ref):
    # p_ref:  (Kdim, tile_hw) bf16 im2col patches for one (image, hw-tile)
    # w_ref:  (Cout, Kdim)    bf16 conv weight
    # y_ref:  (Cout, tile_hw) bf16 conv output tile (cached for pass 2)
    # sum_ref/sq_ref: (Cout, 1) f32 per-tile partials (tree-reduced in JAX)
    y = jnp.dot(w_ref[...], p_ref[...], preferred_element_type=jnp.float32)
    y_ref[...] = y.astype(y_ref.dtype)
    sum_ref[...] = jnp.sum(y, axis=1, keepdims=True)
    sq_ref[...] = jnp.sum(y * y, axis=1, keepdims=True)


def _bn_act_kernel(y_ref, scale_ref, shift_ref, o_ref):
    # Pure elementwise: folded BN affine + LeakyReLU over the cached conv tile.
    z = y_ref[...].astype(jnp.float32) * scale_ref[...] + shift_ref[...]
    o_ref[...] = jnp.where(z >= 0, z, LEAKY_SLOPE * z)


def _im2col(x_bf, K, hw_pad):
    # x_bf: (N, Cin, H, W) bf16 -> (N, Cin*K*K, hw_pad) bf16
    # rows ordered (c, ki, kj) c-major (matches conv_w.reshape(Cout, -1)),
    # columns ordered (oh, ow); zero-padded along the column axis.
    N, C, H, W = x_bf.shape
    OH, OW = H - K + 1, W - K + 1
    cols = [x_bf[:, :, i:i + OH, j:j + OW] for i in range(K) for j in range(K)]
    p = jnp.stack(cols, axis=2).reshape(N, C * K * K, OH * OW)
    if hw_pad != OH * OW:
        p = jnp.pad(p, ((0, 0), (0, 0), (0, hw_pad - OH * OW)))
    return p


def _plan_tiles(kdim, cout, ohw, tile_hw_override):
    # Size the hw tile by bytes (~2 MiB of bf16 patch data per grid step) and
    # cap it so the double-buffered working set of either pass stays well
    # under v7x's 64 MiB physical VMEM (v5e/v6e have 128 MiB).
    target_cols = max(128, ((2 << 20) // (2 * kdim)) // 128 * 128)
    worst_bytes_per_col = max(2 * (2 * kdim + 2 * cout),   # pass 1, dbuffered
                              2 * (2 * cout + 4 * cout))   # pass 2, dbuffered
    cap_cols = max(128, ((24 << 20) // worst_bytes_per_col) // 128 * 128)
    max_tile = min(target_cols, cap_cols)
    if tile_hw_override is not None:
        tile_hw = tile_hw_override
    elif ohw <= max_tile:
        tile_hw = ohw           # block == full dim: no padding, free reshape
    else:
        tile_hw = max_tile      # multiple of 128 -> lane-dense stores
    num_tiles = -(-ohw // tile_hw)
    hw_pad = num_tiles * tile_hw
    live = (2 * (kdim * tile_hw * 2 + cout * kdim * 2)
            + 2 * cout * tile_hw * 2 + 2 * cout * tile_hw * 4)
    vmem_limit = int(min(48 << 20, max(16 << 20, 2 * live)))
    return tile_hw, num_tiles, hw_pad, vmem_limit


@functools.partial(jax.jit, static_argnames=("kernel_size", "tile_hw_override"))
def encoder_forward(x, conv_w, conv_b, bn_gamma, bn_beta, *, kernel_size,
                    tile_hw_override=None):
    # conv_b is accepted for API fidelity but unused: training-mode BN mean
    # subtraction cancels a per-channel additive bias exactly.
    del conv_b

    N, C_in, H, W = x.shape
    C_out = conv_w.shape[0]
    K = kernel_size
    OH, OW = H - K + 1, W - K + 1
    OHW = OH * OW
    Kdim = C_in * K * K

    tile_hw, num_t, hw_pad, vmem_limit = _plan_tiles(
        Kdim, C_out, OHW, tile_hw_override)

    # bf16 MXU operands built once, directly in bf16; f32 accumulation inside.
    patches = _im2col(x.astype(jnp.bfloat16), K, hw_pad)   # (N, Kdim, hw_pad)
    w_bf = conv_w.reshape(C_out, Kdim).astype(jnp.bfloat16)

    p_spec = pl.BlockSpec((None, Kdim, tile_hw), lambda n, t: (n, 0, t))
    w_spec = pl.BlockSpec((C_out, Kdim), lambda n, t: (0, 0))
    tile_spec = pl.BlockSpec((None, C_out, tile_hw), lambda n, t: (n, 0, t))
    part_spec = pl.BlockSpec((None, None, C_out, 1), lambda n, t: (n, t, 0, 0))
    vec_spec = pl.BlockSpec((C_out, 1), lambda n, t: (0, 0))
    cparams = pltpu.CompilerParams(
        dimension_semantics=("parallel", "parallel"),
        vmem_limit_bytes=vmem_limit)

    # ---- Pass 1: conv tile (MXU) + per-tile partial BN statistics ----
    y_bf, psum, psq = pl.pallas_call(
        _conv_stats_kernel,
        out_shape=(jax.ShapeDtypeStruct((N, C_out, hw_pad), jnp.bfloat16),
                   jax.ShapeDtypeStruct((N, num_t, C_out, 1), jnp.float32),
                   jax.ShapeDtypeStruct((N, num_t, C_out, 1), jnp.float32)),
        grid=(N, num_t),
        in_specs=[p_spec, w_spec],
        out_specs=(tile_spec, part_spec, part_spec),
        compiler_params=cparams,
    )(patches, w_bf)

    # ---- Fold BN into a per-channel affine (tiny f32 JAX ops) ----
    # Zero-padded columns contribute 0 to both partials; divide by true count.
    count = N * OHW
    ch_sum = jnp.sum(psum, axis=(0, 1))                  # (C_out, 1)
    ch_sq = jnp.sum(psq, axis=(0, 1))
    mean = ch_sum / count
    var = jnp.maximum(ch_sq / count - mean * mean, 0.0)  # biased variance
    inv_std = jax.lax.rsqrt(var + BN_EPS)
    scale = bn_gamma.reshape(C_out, 1).astype(jnp.float32) * inv_std
    shift = bn_beta.reshape(C_out, 1).astype(jnp.float32) - mean * scale

    # ---- Pass 2: elementwise affine + LeakyReLU over the cached conv ----
    out_full = pl.pallas_call(
        _bn_act_kernel,
        out_shape=jax.ShapeDtypeStruct((N, C_out, hw_pad), jnp.float32),
        grid=(N, num_t),
        in_specs=[tile_spec, vec_spec, vec_spec],
        out_specs=tile_spec,
        compiler_params=cparams,
    )(y_bf, scale, shift)

    # Output is already NCHW-ordered: free reshape (plus a last-dim slice only
    # when OH*OW had to be padded to a multiple of tile_hw).
    if hw_pad != OHW:
        out_full = out_full[:, :, :OHW]
    return out_full.reshape(N, C_out, OH, OW)


def _reference(x, conv_w, conv_b, bn_gamma, bn_beta):
    # Pure-JAX f32 reference with exact PyTorch training-mode semantics.
    y = jax.lax.conv_general_dilated(
        x, conv_w, window_strides=(1, 1), padding="VALID",
        dimension_numbers=("NCHW", "OIHW", "NCHW"))
    y = y + conv_b.reshape(1, -1, 1, 1)
    mean = jnp.mean(y, axis=(0, 2, 3), keepdims=True)
    var = jnp.mean((y - mean) ** 2, axis=(0, 2, 3), keepdims=True)
    y = (y - mean) / jnp.sqrt(var + BN_EPS)
    y = y * bn_gamma.reshape(1, -1, 1, 1) + bn_beta.reshape(1, -1, 1, 1)
    return jnp.where(y >= 0, y, LEAKY_SLOPE * y)


if __name__ == "__main__":
    # Encoder(inputs=4, outputs=8, kernel=3) at small shapes.
    N, C_in, H, W = 2, 4, 16, 16
    C_out, K = 8, 3

    key = jax.random.PRNGKey(0)
    kx, kw, kb, kg, kbe = jax.random.split(key, 5)

    x = jax.random.normal(kx, (N, C_in, H, W), dtype=jnp.float32)
    fan_in = C_in * K * K
    bound = 1.0 / (fan_in ** 0.5)
    conv_w = jax.random.uniform(kw, (C_out, C_in, K, K), jnp.float32, -bound, bound)
    conv_b = jax.random.uniform(kb, (C_out,), jnp.float32, -bound, bound)
    bn_gamma = jnp.ones((C_out,), jnp.float32) + 0.1 * jax.random.normal(kg, (C_out,))
    bn_beta = 0.1 * jax.random.normal(kbe, (C_out,))

    ref = _reference(x, conv_w, conv_b, bn_gamma, bn_beta)

    # Default plan: one full-width hw tile per image (no padding, free reshape).
    out = encoder_forward(x, conv_w, conv_b, bn_gamma, bn_beta, kernel_size=K)
    out = jax.block_until_ready(out)
    assert out.shape == (N, C_out, H - K + 1, W - K + 1), out.shape
    # bf16 MXU operands dominate the error budget; f32 accumulation keeps it
    # tight after BN normalization.
    assert jnp.allclose(out, ref, atol=5e-2, rtol=5e-2), \
        float(jnp.max(jnp.abs(out - ref)))

    # Forced small tiles: exercises the multi-tile grid, column padding and the
    # cross-tile partial-sum reduction path (OH*OW = 196 -> 2 tiles of 128).
    out_tiled = encoder_forward(x, conv_w, conv_b, bn_gamma, bn_beta,
                                kernel_size=K, tile_hw_override=128)
    out_tiled = jax.block_until_ready(out_tiled)
    assert jnp.allclose(out_tiled, ref, atol=5e-2, rtol=5e-2), \
        float(jnp.max(jnp.abs(out_tiled - ref)))

    print("KERNEL_OK")
</pallas_src>

<mosaic_0001>
module attributes {stable_mosaic.version = 11 : i64} {
  func.func @_conv_stats_kernel(%arg0: i32, %arg1: i32, %arg2: memref<1x36x196xbf16, #tpu.memory_space<vmem>>, %arg3: memref<8x36xbf16, #tpu.memory_space<vmem>>, %arg4: memref<1x8x196xbf16, #tpu.memory_space<vmem>>, %arg5: memref<1x1x8x1xf32, #tpu.memory_space<vmem>>, %arg6: memref<1x1x8x1xf32, #tpu.memory_space<vmem>>) attributes {dimension_semantics = [#tpu.dimension_semantics<parallel>, #tpu.dimension_semantics<parallel>], iteration_bounds = array<i64: 2, 1>, scalar_prefetch = 0 : i64, scratch_operands = 0 : i64, tpu.core_type = #tpu.core_type<tc>, window_params = [{transform_indices = @transform_0, window_bounds = array<i64: 1, 36, 196>}, {pipeline_mode = #tpu.pipeline_mode<synchronous>, transform_indices = @transform_1, window_bounds = array<i64: 8, 36>}, {transform_indices = @transform_2, window_bounds = array<i64: 1, 8, 196>}, {transform_indices = @transform_3, window_bounds = array<i64: 1, 1, 8, 1>}, {transform_indices = @transform_4, window_bounds = array<i64: 1, 1, 8, 1>}]} {
    %c0 = arith.constant 0 : index
    %c0_0 = arith.constant 0 : index
    %0 = vector.load %arg3[%c0, %c0_0] : memref<8x36xbf16, #tpu.memory_space<vmem>>, vector<8x36xbf16>
    %c0_1 = arith.constant 0 : index
    %c0_2 = arith.constant 0 : index
    %c0_3 = arith.constant 0 : index
    %1 = vector.load %arg2[%c0_1, %c0_2, %c0_3] : memref<1x36x196xbf16, #tpu.memory_space<vmem>>, vector<1x36x196xbf16>
    %2 = vector.shape_cast %1 : vector<1x36x196xbf16> to vector<36x196xbf16>
    %cst = arith.constant dense<0.000000e+00> : vector<8x196xf32>
    %3 = tpu.matmul %0, %2, %cst {dimension_numbers = #tpu.dot_dimension_numbers<[1], [0], [0], [1], [0, 0, 1, 1], [], []>} : vector<8x36xbf16>, vector<36x196xbf16>, vector<8x196xf32> -> vector<8x196xf32>
    %4 = arith.truncf %3 : vector<8x196xf32> to vector<8x196xbf16>
    %c0_4 = arith.constant 0 : index
    %c0_5 = arith.constant 0 : index
    %c0_6 = arith.constant 0 : index
    %5 = vector.load %arg4[%c0_4, %c0_5, %c0_6] : memref<1x8x196xbf16, #tpu.memory_space<vmem>>, vector<1x8x196xbf16>
    %6 = vector.shape_cast %5 : vector<1x8x196xbf16> to vector<8x196xbf16>
    %7 = vector.shape_cast %4 : vector<8x196xbf16> to vector<1x8x196xbf16>
    tpu.vector_store %arg4[%c0_4, %c0_5, %c0_6], %7 {strides = array<i32>} : memref<1x8x196xbf16, #tpu.memory_space<vmem>>, vector<1x8x196xbf16>,
    %cst_7 = arith.constant dense<0.000000e+00> : vector<8xf32>
    %8 = vector.multi_reduction <add>, %3, %cst_7 [1] : vector<8x196xf32> to vector<8xf32>
    %9 = vector.shape_cast %8 : vector<8xf32> to vector<8x1xf32>
    %c0_8 = arith.constant 0 : index
    %c0_9 = arith.constant 0 : index
    %c0_10 = arith.constant 0 : index
    %c0_11 = arith.constant 0 : index
    %10 = vector.load %arg5[%c0_8, %c0_9, %c0_10, %c0_11] : memref<1x1x8x1xf32, #tpu.memory_space<vmem>>, vector<1x1x8x1xf32>
    %11 = vector.shape_cast %10 : vector<1x1x8x1xf32> to vector<8x1xf32>
    %12 = vector.shape_cast %9 : vector<8x1xf32> to vector<1x1x8x1xf32>
    tpu.vector_store %arg5[%c0_8, %c0_9, %c0_10, %c0_11], %12 {strides = array<i32>} : memref<1x1x8x1xf32, #tpu.memory_space<vmem>>, vector<1x1x8x1xf32>,
    %13 = arith.mulf %3, %3 : vector<8x196xf32>
    %cst_12 = arith.constant dense<0.000000e+00> : vector<8xf32>
    %14 = vector.multi_reduction <add>, %13, %cst_12 [1] : vector<8x196xf32> to vector<8xf32>
    %15 = vector.shape_cast %14 : vector<8xf32> to vector<8x1xf32>
    %c0_13 = arith.constant 0 : index
    %c0_14 = arith.constant 0 : index
    %c0_15 = arith.constant 0 : index
    %c0_16 = arith.constant 0 : index
    %16 = vector.load %arg6[%c0_13, %c0_14, %c0_15, %c0_16] : memref<1x1x8x1xf32, #tpu.memory_space<vmem>>, vector<1x1x8x1xf32>
    %17 = vector.shape_cast %16 : vector<1x1x8x1xf32> to vector<8x1xf32>
    %18 = vector.shape_cast %15 : vector<8x1xf32> to vector<1x1x8x1xf32>
    tpu.vector_store %arg6[%c0_13, %c0_14, %c0_15, %c0_16], %18 {strides = array<i32>} : memref<1x1x8x1xf32, #tpu.memory_space<vmem>>, vector<1x1x8x1xf32>,
    return
  }
  func.func @transform_0(%arg0: i32, %arg1: i32) -> (i32, i32, i32) {
    %c0_i32 = arith.constant 0 : i32
    %c0_i32_0 = arith.constant 0 : i32
    return %arg0, %c0_i32, %arg1 : i32, i32, i32
  }
  func.func @transform_1(%arg0: i32, %arg1: i32) -> (i32, i32) {
    %c0_i32 = arith.constant 0 : i32
    %c0_i32_0 = arith.constant 0 : i32
    %c0_i32_1 = arith.constant 0 : i32
    return %c0_i32, %c0_i32_0 : i32, i32
  }
  func.func @transform_2(%arg0: i32, %arg1: i32) -> (i32, i32, i32) {
    %c0_i32 = arith.constant 0 : i32
    %c0_i32_0 = arith.constant 0 : i32
    return %arg0, %c0_i32, %arg1 : i32, i32, i32
  }
  func.func @transform_3(%arg0: i32, %arg1: i32) -> (i32, i32, i32, i32) {
    %c0_i32 = arith.constant 0 : i32
    %c0_i32_0 = arith.constant 0 : i32
    %c0_i32_1 = arith.constant 0 : i32
    return %arg0, %arg1, %c0_i32, %c0_i32_0 : i32, i32, i32, i32
  }
  func.func @transform_4(%arg0: i32, %arg1: i32) -> (i32, i32, i32, i32) {
    %c0_i32 = arith.constant 0 : i32
    %c0_i32_0 = arith.constant 0 : i32
    %c0_i32_1 = arith.constant 0 : i32
    return %arg0, %arg1, %c0_i32, %c0_i32_0 : i32, i32, i32, i32
  }
}

module attributes {stable_mosaic.version = 11 : i64} {
  func.func @_bn_act_kernel(%arg0: i32, %arg1: i32, %arg2: memref<1x8x196xbf16, #tpu.memory_space<vmem>>, %arg3: memref<8x1xf32, #tpu.memory_space<vmem>>, %arg4: memref<8x1xf32, #tpu.memory_space<vmem>>, %arg5: memref<1x8x196xf32, #tpu.memory_space<vmem>>) attributes {dimension_semantics = [#tpu.dimension_semantics<parallel>, #tpu.dimension_semantics<parallel>], iteration_bounds = array<i64: 2, 1>, scalar_prefetch = 0 : i64, scratch_operands = 0 : i64, tpu.core_type = #tpu.core_type<tc>, window_params = [{transform_indices = @transform_0, window_bounds = array<i64: 1, 8, 196>}, {pipeline_mode = #tpu.pipeline_mode<synchronous>, transform_indices = @transform_1, window_bounds = array<i64: 8, 1>}, {pipeline_mode = #tpu.pipeline_mode<synchronous>, transform_indices = @transform_2, window_bounds = array<i64: 8, 1>}, {transform_indices = @transform_3, window_bounds = array<i64: 1, 8, 196>}]} {
    %c0 = arith.constant 0 : index
    %c0_0 = arith.constant 0 : index
    %c0_1 = arith.constant 0 : index
    %0 = vector.load %arg2[%c0, %c0_0, %c0_1] : memref<1x8x196xbf16, #tpu.memory_space<vmem>>, vector<1x8x196xbf16>
    %1 = vector.shape_cast %0 : vector<1x8x196xbf16> to vector<8x196xbf16>
    %2 = arith.extf %1 : vector<8x196xbf16> to vector<8x196xf32>
    %c0_2 = arith.constant 0 : index
    %c0_3 = arith.constant 0 : index
    %3 = vector.load %arg3[%c0_2, %c0_3] : memref<8x1xf32, #tpu.memory_space<vmem>>, vector<8x1xf32>
    %4 = vector.broadcast %3 : vector<8x1xf32> to vector<8x196xf32>
    %5 = arith.mulf %2, %4 : vector<8x196xf32>
    %c0_4 = arith.constant 0 : index
    %c0_5 = arith.constant 0 : index
    %6 = vector.load %arg4[%c0_4, %c0_5] : memref<8x1xf32, #tpu.memory_space<vmem>>, vector<8x1xf32>
    %7 = vector.broadcast %6 : vector<8x1xf32> to vector<8x196xf32>
    %8 = arith.addf %5, %7 : vector<8x196xf32>
    %cst = arith.constant 0.000000e+00 : f32
    %9 = vector.broadcast %cst : f32 to vector<8x196xf32>
    %10 = arith.cmpf oge, %8, %9 : vector<8x196xf32>
    %cst_6 = arith.constant 0.00999999977 : f32
    %11 = vector.broadcast %cst_6 : f32 to vector<8x196xf32>
    %12 = arith.mulf %11, %8 : vector<8x196xf32>
    %13 = arith.select %10, %8, %12 : vector<8x196xi1>, vector<8x196xf32>
    %c0_7 = arith.constant 0 : index
    %c0_8 = arith.constant 0 : index
    %c0_9 = arith.constant 0 : index
    %14 = vector.load %arg5[%c0_7, %c0_8, %c0_9] : memref<1x8x196xf32, #tpu.memory_space<vmem>>, vector<1x8x196xf32>
    %15 = vector.shape_cast %14 : vector<1x8x196xf32> to vector<8x196xf32>
    %16 = vector.shape_cast %13 : vector<8x196xf32> to vector<1x8x196xf32>
    tpu.vector_store %arg5[%c0_7, %c0_8, %c0_9], %16 {strides = array<i32>} : memref<1x8x196xf32, #tpu.memory_space<vmem>>, vector<1x8x196xf32>,
    return
  }
  func.func @transform_0(%arg0: i32, %arg1: i32) -> (i32, i32, i32) {
    %c0_i32 = arith.constant 0 : i32
    %c0_i32_0 = arith.constant 0 : i32
    return %arg0, %c0_i32, %arg1 : i32, i32, i32
  }
  func.func @transform_1(%arg0: i32, %arg1: i32) -> (i32, i32) {
    %c0_i32 = arith.constant 0 : i32
    %c0_i32_0 = arith.constant 0 : i32
    %c0_i32_1 = arith.constant 0 : i32
    return %c0_i32, %c0_i32_0 : i32, i32
  }
  func.func @transform_2(%arg0: i32, %arg1: i32) -> (i32, i32) {
    %c0_i32 = arith.constant 0 : i32
    %c0_i32_0 = arith.constant 0 : i32
    %c0_i32_1 = arith.constant 0 : i32
    return %c0_i32, %c0_i32_0 : i32, i32
  }
  func.func @transform_3(%arg0: i32, %arg1: i32) -> (i32, i32, i32) {
    %c0_i32 = arith.constant 0 : i32
    %c0_i32_0 = arith.constant 0 : i32
    return %arg0, %c0_i32, %arg1 : i32, i32, i32
  }
}

</mosaic_0001>

<llo_original>
// kernel: encoder_forward.3
$region0: #{encoder_forward.3}
  #allocation0 [shape = 'u32[]', space=smem, size = 0x4, offset = 0x4, fixed_abs, tag = 'smem constant byte address 0x4 - core index']
  #allocation1 [shape = 'u32[72,128]{1,0:T(1,128)}', space=vmem, size = 0x9000, scoped, tag = 'internal scratch']
  %s0 = inlined_call_operand.vmem [shape: bf16[2,8,196], index: 0, kind: input, shape index: {}]
  %s1 = inlined_call_operand.vmem [shape: f32[8,1], index: 1, kind: input, shape index: {}]
  %s2 = inlined_call_operand.vmem [shape: f32[8,1], index: 2, kind: input, shape index: {}]
  %s3 = inlined_call_operand.vmem [shape: f32[2,8,196], index: 3, kind: output, shape index: {}]
  %s4 = sld [smem:[#allocation0]]
  $region45: #{encoder_forward.3} parent=0
    _
  %s6 = ssub.s32 1, %s4
  %s7 = scalar_select 0, %s6, %s4
  loop: start=0, step=1, limit=4
  $region2: #{encoder_forward.3} parent=0 // loop_pre_header
    _
  $region3: #{encoder_forward.3} parent=0 // loop_header
    %s9 = sphi 0, %s13
    %p10 = scmp.ge.s32.totalorder %s9, 4
    %s16 = sphi 0, %s28
    %s17 = sphi 0, %s24
    %s18 = sphi 0, %s16
    %s19 = sphi 0, %s17
    %s20 = sphi 0, %s18
    %s21 = sphi 0, %s19
    %s33 = sphi 0, %s35
    %s36 = sphi 0, %s33
    %s37 = sphi 0, %s36
    %s53 = sphi 0, %s37
    %s57 = sphi 0, %s57
    %s59 = sphi 0, %s57
    %s60 = sphi 0, %s59
    %s74 = sphi 0, %s60
    %s78 = sphi 0, %s78
    %s80 = sphi 0, %s78
    %s81 = sphi 0, %s80
    %s95 = sphi 0, %s81
    %s103 = sphi 0, %s105
    %s106 = sphi 0, %s103
    %s107 = sphi 0, %s106
    %s123 = sphi 0, %s107
  $region4: #{encoder_forward.3} parent=0 // loop_header_branch
    %12 = sbr.rel (%p10) target = $region8
  $region5: #{encoder_forward.3} parent=0 // loop_body
    %s14 = ssub.s32 %s9, 1
    %s15 = ssub.s32 %s9, 2
    %s22 = sadd.s32 1, %s17
    %p23 = scmp.ge.s32.totalorder %s22, 1
    %s24 = scalar_select %p23, 0, %s22
    %s25 = sadd.s32 1, %s16
    %s26 = scalar_select %p23, %s25, %s16
    %p27 = scmp.ge.s32.totalorder %s26, 2
    %s28 = scalar_select %p27, 0, %s26
    %s29 = ssub.s32 %s16, %s28
    %s30 = ssub.s32 %s17, %s24
    %s31 = sor.u32 %s29, %s30
    %p32 = scmp.eq.s32.totalorder %s31, 0
    %s34 = sadd.s32 %s33, 1
    %s35 = scalar_select %p32, %s33, %s34
    %p38 = pneg %p32
    %p39 = scmp.eq.s32.totalorder %s9, 1
    %p40 = por %p38, %p39
    %p41 = scmp.ne.s32.totalorder %s33, %s36
    %p42 = scmp.eq.s32.totalorder %s9, 0
    %p43 = por %p41, %p42
    %p44 = scmp.ne.s32.totalorder %s33, %s36
    %p45 = scmp.eq.s32.totalorder %s14, 1
    %p46 = por %p44, %p45
    %p47 = scmp.ne.s32.totalorder %s36, %s37
    %p48 = scmp.eq.s32.totalorder %s14, 0
    %p49 = por %p47, %p48
    %p50 = scmp.ne.s32.totalorder %s36, %s37
    %p51 = scmp.eq.s32.totalorder %s15, 1
    %p52 = por %p50, %p51
    %p54 = scmp.ne.s32.totalorder %s37, %s53
    %p55 = scmp.eq.s32.totalorder %s15, 0
    %p56 = por %p54, %p55
    %s58 = sadd.s32 %s57, 1
    %p61 = scmp.eq.s32.totalorder %s9, 1
    %p62 = scmp.ne.s32.totalorder %s57, %s59
    %p63 = scmp.eq.s32.totalorder %s9, 0
    %p64 = por %p62, %p63
    %p65 = scmp.ne.s32.totalorder %s57, %s59
    %p66 = scmp.eq.s32.totalorder %s14, 1
    %p67 = por %p65, %p66
    %p68 = scmp.ne.s32.totalorder %s59, %s60
    %p69 = scmp.eq.s32.totalorder %s14, 0
    %p70 = por %p68, %p69
    %p71 = scmp.ne.s32.totalorder %s59, %s60
    %p72 = scmp.eq.s32.totalorder %s15, 1
    %p73 = por %p71, %p72
    %p75 = scmp.ne.s32.totalorder %s60, %s74
    %p76 = scmp.eq.s32.totalorder %s15, 0
    %p77 = por %p75, %p76
    %s79 = sadd.s32 %s78, 1
    %p82 = scmp.eq.s32.totalorder %s9, 1
    %p83 = scmp.ne.s32.totalorder %s78, %s80
    %p84 = scmp.eq.s32.totalorder %s9, 0
    %p85 = por %p83, %p84
    %p86 = scmp.ne.s32.totalorder %s78, %s80
    %p87 = scmp.eq.s32.totalorder %s14, 1
    %p88 = por %p86, %p87
    %p89 = scmp.ne.s32.totalorder %s80, %s81
    %p90 = scmp.eq.s32.totalorder %s14, 0
    %p91 = por %p89, %p90
    %p92 = scmp.ne.s32.totalorder %s80, %s81
    %p93 = scmp.eq.s32.totalorder %s15, 1
    %p94 = por %p92, %p93
    %p96 = scmp.ne.s32.totalorder %s81, %s95
    %p97 = scmp.eq.s32.totalorder %s15, 0
    %p98 = por %p96, %p97
    %s99 = ssub.s32 %s16, %s28
    %s100 = ssub.s32 %s17, %s24
    %s101 = sor.u32 %s99, %s100
    %p102 = scmp.eq.s32.totalorder %s101, 0
    %s104 = sadd.s32 %s103, 1
    %s105 = scalar_select %p102, %s103, %s104
    %p108 = pneg %p102
    %p109 = scmp.eq.s32.totalorder %s9, 1
    %p110 = por %p108, %p109
    %p111 = scmp.ne.s32.totalorder %s103, %s106
    %p112 = scmp.eq.s32.totalorder %s9, 0
    %p113 = por %p111, %p112
    %p114 = scmp.ne.s32.totalorder %s103, %s106
    %p115 = scmp.eq.s32.totalorder %s14, 1
    %p116 = por %p114, %p115
    %p117 = scmp.ne.s32.totalorder %s106, %s107
    %p118 = scmp.eq.s32.totalorder %s14, 0
    %p119 = por %p117, %p118
    %p120 = scmp.ne.s32.totalorder %s106, %s107
    %p121 = scmp.eq.s32.totalorder %s15, 1
    %p122 = por %p120, %p121
    %p124 = scmp.ne.s32.totalorder %s107, %s123
    %p125 = scmp.eq.s32.totalorder %s15, 0
    %p126 = por %p124, %p125
    %p127 = scmp.le.s32.totalorder 1, %s9
    %p128 = scmp.lt.s32.totalorder %s9, 3
    %p129 = pnand %p127, %p128
    %p130 = pneg %p129
    // Predicated region
    $region9: #{encoder_forward.3} parent=5 // pred_check
      _
    $region10: #{encoder_forward.3} parent=5 // pred_check_branch
      %132 = sbr.rel (%p129) target = $region12
    $region11: #{encoder_forward.3} parent=5 // pred_region
      %s133 = ssub.s32 %s9, 1
      // Predicated region
      $region13: #{encoder_forward.3} parent=11 // pred_check
        %p134 = pneg %p70
      $region14: #{encoder_forward.3} parent=11 // pred_check_branch
        %136 = sbr.rel (%p134) target = $region16
      $region15: #{encoder_forward.3} parent=11 // pred_region
        _
      $region16: #{encoder_forward.3} parent=11 // pred_fallthru
        _
      // Predicated region
      $region17: #{encoder_forward.3} parent=11 // pred_check
        %p137 = pneg %p91
      $region18: #{encoder_forward.3} parent=11 // pred_check_branch
        %139 = sbr.rel (%p137) target = $region20
      $region19: #{encoder_forward.3} parent=11 // pred_region
        _
      $region20: #{encoder_forward.3} parent=11 // pred_fallthru
        _
    $region12: #{encoder_forward.3} parent=5 // pred_fallthru
      _
    %p140 = scmp.lt.s32.totalorder %s9, 2
    // Predicated region
    $region21: #{encoder_forward.3} parent=5 // pred_check
      %p141 = pneg %p140
    $region22: #{encoder_forward.3} parent=5 // pred_check_branch
      %143 = sbr.rel (%p141) target = $region24
    $region23: #{encoder_forward.3} parent=5 // pred_region
      // Predicated region
      $region25: #{encoder_forward.3} parent=23 // pred_check
        %p144 = pneg %p43
      $region26: #{encoder_forward.3} parent=23 // pred_check_branch
        %146 = sbr.rel (%p144) target = $region28
      $region27: #{encoder_forward.3} parent=23 // pred_region
        %s147 = smul.u32 2, %s17
        %p148 = scmp.lt.s32.totalorder %s16, 1
        %s149 = scalar_select %p148, %s16, 1
        %p150 = scmp.lt.s32.totalorder %s147, 1
        %s151 = scalar_select %p150, %s147, 1
        %s152 = smul.addr %s149, 2
        %s153 = sadd.s32 %s151, %s152
        %s154 = smul.addr %s153, 4
        %s155 = scalar_lea.vmem %s0, %s154
        %s156 = smul.u32 2, %s17
      $region28: #{encoder_forward.3} parent=23 // pred_fallthru
        _
    $region24: #{encoder_forward.3} parent=5 // pred_fallthru
      _
    %p157 = scmp.le.s32.totalorder 1, %s9
    %p158 = scmp.lt.s32.totalorder %s9, 3
    %p159 = pnand %p157, %p158
    %p160 = pneg %p159
    // Predicated region
    $region29: #{encoder_forward.3} parent=5 // pred_check
      _
    $region30: #{encoder_forward.3} parent=5 // pred_check_branch
      %162 = sbr.rel (%p159) target = $region32
    $region31: #{encoder_forward.3} parent=5 // pred_region
      %s163 = ssub.s32 %s9, 1
      %s164 = smul.u32 2, %s19
      %p165 = scmp.lt.s32.totalorder %s18, 1
      %s166 = scalar_select %p165, %s18, 1
      %p167 = scmp.lt.s32.totalorder %s164, 1
      %s168 = scalar_select %p167, %s164, 1
      %s169 = smul.addr %s166, 2
      %s170 = sadd.s32 %s168, %s169
      %s171 = smul.addr %s170, 4
      %s172 = scalar_lea.vmem %s0, %s171
      %p173 = pneg %p49
      %p174 = pneg %p46
      %p175 = pneg %p70
      %p176 = pneg %p67
      %p177 = pneg %p91
      %p178 = pneg %p88
      %p179 = pneg %p119
      %p180 = pneg %p116
      %s181 = smul.u32 2, %s19
      %p182 = scmp.lt.s32.totalorder %s18, 1
      %s183 = scalar_select %p182, %s18, 1
      %p184 = scmp.lt.s32.totalorder %s181, 1
      %s185 = scalar_select %p184, %s181, 1
      %s186 = smul.addr %s183, 2
      %s187 = sadd.s32 %s185, %s186
      %s188 = smul.addr %s187, 8
      %s189 = scalar_lea.vmem %s3, %s188
      %s190 = smul.u32 2, %s19
      %p191 = scmp.lt.s32.totalorder %s18, 1
      %s192 = scalar_select %p191, %s18, 1
      %p193 = scmp.lt.s32.totalorder %s190, 1
      %s194 = scalar_select %p193, %s190, 1
      %s195 = smul.addr %s192, 2
      %s196 = sadd.s32 %s194, %s195
      %s197 = smul.addr %s196, 4
      %s198 = scalar_lea.vmem %s0, %s197
      %s199 = smul.u32 2, %s19
      %s200 = smul.u32 2, %s19
      %p201 = scmp.lt.s32.totalorder %s18, 1
      %s202 = scalar_select %p201, %s18, 1
      %p203 = scmp.lt.s32.totalorder %s200, 1
      %s204 = scalar_select %p203, %s200, 1
      %s205 = smul.addr %s202, 2
      %s206 = sadd.s32 %s204, %s205
      %s207 = smul.addr %s206, 8
      %s208 = scalar_lea.vmem %s3, %s207
      %s209 = smul.u32 2, %s19
      %v210 = vld [vmem:[%s198] sm:$0xff]
      %v211 = vunpack.c.l.bf16 %v210
      %v212 = vunpack.c.h.bf16 %v210
      %v213 = vld [vmem:[%s1] sm:$0xff]
      %215 = vset.pattern.permute.xlu0 0
      %216 = vperm.xlu0 %215, %v213
      %v217 = vpop.permute.xlu0 %216
      %v219 = vmul.f32 %v211, %v217
      %v220 = vmul.f32 %v212, %v217
      %v221 = vld [vmem:[%s2] sm:$0xff]
      %223 = vset.pattern.permute.xlu0 0
      %224 = vperm.xlu0 %223, %v221
      %v225 = vpop.permute.xlu0 %224
      %v227 = vadd.f32 %v219, %v225
      %v228 = vadd.f32 %v220, %v225
      %vm229 = vcmp.ge.f32.partialorder %v227, 0.0
      %vm230 = vcmp.ge.f32.partialorder %v228, 0.0
      %v231 = vmul.f32 %v227, 0.01
      %v232 = vmul.f32 %v228, 0.01
      %v233 = vsel %vm229, %v227, %v231
      %v234 = vsel %vm230, %v228, %v232
      %235 = vst [vmem:[%s208] sm:$0xff] %v233
      %vm236 = vcmask 556032
      %237 = vst.msk [vmem:[%s208 + $0x8] sm:$0xff] %vm236, %v234
      %s238 = smul.u32 2, %s19
      %p239 = scmp.lt.s32.totalorder %s18, 1
      %s240 = scalar_select %p239, %s18, 1
      %p241 = scmp.lt.s32.totalorder %s238, 1
      %s242 = scalar_select %p241, %s238, 1
      %s243 = smul.addr %s240, 2
      %s244 = sadd.s32 %s242, %s243
      %s245 = smul.addr %s244, 8
      %s246 = scalar_lea.vmem %s3, %s245
      // Predicated region
      $region33: #{encoder_forward.3} parent=31 // pred_check
        %p247 = pneg %p116
      $region34: #{encoder_forward.3} parent=31 // pred_check_branch
        %249 = sbr.rel (%p247) target = $region36
      $region35: #{encoder_forward.3} parent=31 // pred_region
        %s250 = smul.u32 2, %s19
      $region36: #{encoder_forward.3} parent=31 // pred_fallthru
        _
    $region32: #{encoder_forward.3} parent=5 // pred_fallthru
      _
    %p251 = scmp.le.s32.totalorder 2, %s9
    // Predicated region
    $region37: #{encoder_forward.3} parent=5 // pred_check
      %p252 = pneg %p251
    $region38: #{encoder_forward.3} parent=5 // pred_check_branch
      %254 = sbr.rel (%p252) target = $region40
    $region39: #{encoder_forward.3} parent=5 // pred_region
      %s255 = ssub.s32 %s9, 2
      // Predicated region
      $region41: #{encoder_forward.3} parent=39 // pred_check
        %p256 = pneg %p122
      $region42: #{encoder_forward.3} parent=39 // pred_check_branch
        %258 = sbr.rel (%p256) target = $region44
      $region43: #{encoder_forward.3} parent=39 // pred_region
        %s259 = smul.u32 2, %s21
        %p260 = scmp.lt.s32.totalorder %s20, 1
        %s261 = scalar_select %p260, %s20, 1
        %p262 = scmp.lt.s32.totalorder %s259, 1
        %s263 = scalar_select %p262, %s259, 1
        %s264 = smul.addr %s261, 2
        %s265 = sadd.s32 %s263, %s264
        %s266 = smul.addr %s265, 8
        %s267 = scalar_lea.vmem %s3, %s266
      $region44: #{encoder_forward.3} parent=39 // pred_fallthru
        _
    $region40: #{encoder_forward.3} parent=5 // pred_fallthru
      _
  $region6: #{encoder_forward.3} parent=0 // loop_footer
    %s13 = sadd.s32 1, %s9
  $region7: #{encoder_forward.3} parent=0 // loop_footer_branch
    %8 = sbr.rel target = $region3
  $region8: #{encoder_forward.3} parent=0 // loop_exit
    _

// kernel: encoder_forward.2
$region0: #{encoder_forward.2}
  #allocation0 [shape = 'u32[]', space=smem, size = 0x4, offset = 0x4, fixed_abs, tag = 'smem constant byte address 0x4 - core index']
  #allocation1 [shape = 'u32[72,128]{1,0:T(1,128)}', space=vmem, size = 0x9000, scoped, tag = 'internal scratch']
  %s0 = inlined_call_operand.vmem [shape: bf16[2,36,196], index: 0, kind: input, shape index: {}]
  %s1 = inlined_call_operand.vmem [shape: bf16[8,36], index: 1, kind: input, shape index: {}]
  %s2 = inlined_call_operand.vmem [shape: bf16[2,8,196], index: 2, kind: output, shape index: {0}]
  %s3 = inlined_call_operand.vmem [shape: f32[2,1,8,1], index: 3, kind: output, shape index: {1}]
  %s4 = inlined_call_operand.vmem [shape: f32[2,1,8,1], index: 4, kind: output, shape index: {2}]
  %5 = xla_tuple %s2, %s3, %s4
  %s6 = sld [smem:[#allocation0]]
  $region57: #{encoder_forward.2} parent=0
    _
  %s8 = ssub.s32 1, %s6
  %s9 = scalar_select 0, %s8, %s6
  loop: start=0, step=1, limit=4
  $region2: #{encoder_forward.2} parent=0 // loop_pre_header
    _
  $region3: #{encoder_forward.2} parent=0 // loop_header
    %s11 = sphi 0, %s15
    %p12 = scmp.ge.s32.totalorder %s11, 4
    %s18 = sphi 0, %s30
    %s19 = sphi 0, %s26
    %s20 = sphi 0, %s18
    %s21 = sphi 0, %s19
    %s22 = sphi 0, %s20
    %s23 = sphi 0, %s21
    %s35 = sphi 0, %s37
    %s38 = sphi 0, %s35
    %s39 = sphi 0, %s38
    %s55 = sphi 0, %s39
    %s59 = sphi 0, %s59
    %s61 = sphi 0, %s59
    %s62 = sphi 0, %s61
    %s76 = sphi 0, %s62
    %s84 = sphi 0, %s86
    %s87 = sphi 0, %s84
    %s88 = sphi 0, %s87
    %s104 = sphi 0, %s88
    %s112 = sphi 0, %s114
    %s115 = sphi 0, %s112
    %s116 = sphi 0, %s115
    %s132 = sphi 0, %s116
    %s140 = sphi 0, %s142
    %s143 = sphi 0, %s140
    %s144 = sphi 0, %s143
    %s160 = sphi 0, %s144
  $region4: #{encoder_forward.2} parent=0 // loop_header_branch
    %14 = sbr.rel (%p12) target = $region8
  $region5: #{encoder_forward.2} parent=0 // loop_body
    %s16 = ssub.s32 %s11, 1
    %s17 = ssub.s32 %s11, 2
    %s24 = sadd.s32 1, %s19
    %p25 = scmp.ge.s32.totalorder %s24, 1
    %s26 = scalar_select %p25, 0, %s24
    %s27 = sadd.s32 1, %s18
    %s28 = scalar_select %p25, %s27, %s18
    %p29 = scmp.ge.s32.totalorder %s28, 2
    %s30 = scalar_select %p29, 0, %s28
    %s31 = ssub.s32 %s18, %s30
    %s32 = ssub.s32 %s19, %s26
    %s33 = sor.u32 %s31, %s32
    %p34 = scmp.eq.s32.totalorder %s33, 0
    %s36 = sadd.s32 %s35, 1
    %s37 = scalar_select %p34, %s35, %s36
    %p40 = pneg %p34
    %p41 = scmp.eq.s32.totalorder %s11, 1
    %p42 = por %p40, %p41
    %p43 = scmp.ne.s32.totalorder %s35, %s38
    %p44 = scmp.eq.s32.totalorder %s11, 0
    %p45 = por %p43, %p44
    %p46 = scmp.ne.s32.totalorder %s35, %s38
    %p47 = scmp.eq.s32.totalorder %s16, 1
    %p48 = por %p46, %p47
    %p49 = scmp.ne.s32.totalorder %s38, %s39
    %p50 = scmp.eq.s32.totalorder %s16, 0
    %p51 = por %p49, %p50
    %p52 = scmp.ne.s32.totalorder %s38, %s39
    %p53 = scmp.eq.s32.totalorder %s17, 1
    %p54 = por %p52, %p53
    %p56 = scmp.ne.s32.totalorder %s39, %s55
    %p57 = scmp.eq.s32.totalorder %s17, 0
    %p58 = por %p56, %p57
    %s60 = sadd.s32 %s59, 1
    %p63 = scmp.eq.s32.totalorder %s11, 1
    %p64 = scmp.ne.s32.totalorder %s59, %s61
    %p65 = scmp.eq.s32.totalorder %s11, 0
    %p66 = por %p64, %p65
    %p67 = scmp.ne.s32.totalorder %s59, %s61
    %p68 = scmp.eq.s32.totalorder %s16, 1
    %p69 = por %p67, %p68
    %p70 = scmp.ne.s32.totalorder %s61, %s62
    %p71 = scmp.eq.s32.totalorder %s16, 0
    %p72 = por %p70, %p71
    %p73 = scmp.ne.s32.totalorder %s61, %s62
    %p74 = scmp.eq.s32.totalorder %s17, 1
    %p75 = por %p73, %p74
    %p77 = scmp.ne.s32.totalorder %s62, %s76
    %p78 = scmp.eq.s32.totalorder %s17, 0
    %p79 = por %p77, %p78
    %s80 = ssub.s32 %s18, %s30
    %s81 = ssub.s32 %s19, %s26
    %s82 = sor.u32 %s80, %s81
    %p83 = scmp.eq.s32.totalorder %s82, 0
    %s85 = sadd.s32 %s84, 1
    %s86 = scalar_select %p83, %s84, %s85
    %p89 = pneg %p83
    %p90 = scmp.eq.s32.totalorder %s11, 1
    %p91 = por %p89, %p90
    %p92 = scmp.ne.s32.totalorder %s84, %s87
    %p93 = scmp.eq.s32.totalorder %s11, 0
    %p94 = por %p92, %p93
    %p95 = scmp.ne.s32.totalorder %s84, %s87
    %p96 = scmp.eq.s32.totalorder %s16, 1
    %p97 = por %p95, %p96
    %p98 = scmp.ne.s32.totalorder %s87, %s88
    %p99 = scmp.eq.s32.totalorder %s16, 0
    %p100 = por %p98, %p99
    %p101 = scmp.ne.s32.totalorder %s87, %s88
    %p102 = scmp.eq.s32.totalorder %s17, 1
    %p103 = por %p101, %p102
    %p105 = scmp.ne.s32.totalorder %s88, %s104
    %p106 = scmp.eq.s32.totalorder %s17, 0
    %p107 = por %p105, %p106
    %s108 = ssub.s32 %s18, %s30
    %s109 = ssub.s32 %s19, %s26
    %s110 = sor.u32 %s108, %s109
    %p111 = scmp.eq.s32.totalorder %s110, 0
    %s113 = sadd.s32 %s112, 1
    %s114 = scalar_select %p111, %s112, %s113
    %p117 = pneg %p111
    %p118 = scmp.eq.s32.totalorder %s11, 1
    %p119 = por %p117, %p118
    %p120 = scmp.ne.s32.totalorder %s112, %s115
    %p121 = scmp.eq.s32.totalorder %s11, 0
    %p122 = por %p120, %p121
    %p123 = scmp.ne.s32.totalorder %s112, %s115
    %p124 = scmp.eq.s32.totalorder %s16, 1
    %p125 = por %p123, %p124
    %p126 = scmp.ne.s32.totalorder %s115, %s116
    %p127 = scmp.eq.s32.totalorder %s16, 0
    %p128 = por %p126, %p127
    %p129 = scmp.ne.s32.totalorder %s115, %s116
    %p130 = scmp.eq.s32.totalorder %s17, 1
    %p131 = por %p129, %p130
    %p133 = scmp.ne.s32.totalorder %s116, %s132
    %p134 = scmp.eq.s32.totalorder %s17, 0
    %p135 = por %p133, %p134
    %s136 = ssub.s32 %s18, %s30
    %s137 = ssub.s32 %s19, %s26
    %s138 = sor.u32 %s136, %s137
    %p139 = scmp.eq.s32.totalorder %s138, 0
    %s141 = sadd.s32 %s140, 1
    %s142 = scalar_select %p139, %s140, %s141
    %p145 = pneg %p139
    %p146 = scmp.eq.s32.totalorder %s11, 1
    %p147 = por %p145, %p146
    %p148 = scmp.ne.s32.totalorder %s140, %s143
    %p149 = scmp.eq.s32.totalorder %s11, 0
    %p150 = por %p148, %p149
    %p151 = scmp.ne.s32.totalorder %s140, %s143
    %p152 = scmp.eq.s32.totalorder %s16, 1
    %p153 = por %p151, %p152
    %p154 = scmp.ne.s32.totalorder %s143, %s144
    %p155 = scmp.eq.s32.totalorder %s16, 0
    %p156 = por %p154, %p155
    %p157 = scmp.ne.s32.totalorder %s143, %s144
    %p158 = scmp.eq.s32.totalorder %s17, 1
    %p159 = por %p157, %p158
    %p161 = scmp.ne.s32.totalorder %s144, %s160
    %p162 = scmp.eq.s32.totalorder %s17, 0
    %p163 = por %p161, %p162
    %p164 = scmp.le.s32.totalorder 1, %s11
    %p165 = scmp.lt.s32.totalorder %s11, 3
    %p166 = pnand %p164, %p165
    %p167 = pneg %p166
    // Predicated region
    $region9: #{encoder_forward.2} parent=5 // pred_check
      _
    $region10: #{encoder_forward.2} parent=5 // pred_check_branch
      %169 = sbr.rel (%p166) target = $region12
    $region11: #{encoder_forward.2} parent=5 // pred_region
      %s170 = ssub.s32 %s11, 1
      // Predicated region
      $region13: #{encoder_forward.2} parent=11 // pred_check
        %p171 = pneg %p72
      $region14: #{encoder_forward.2} parent=11 // pred_check_branch
        %173 = sbr.rel (%p171) target = $region16
      $region15: #{encoder_forward.2} parent=11 // pred_region
        _
      $region16: #{encoder_forward.2} parent=11 // pred_fallthru
        _
    $region12: #{encoder_forward.2} parent=5 // pred_fallthru
      _
    %p174 = scmp.lt.s32.totalorder %s11, 2
    // Predicated region
    $region17: #{encoder_forward.2} parent=5 // pred_check
      %p175 = pneg %p174
    $region18: #{encoder_forward.2} parent=5 // pred_check_branch
      %177 = sbr.rel (%p175) target = $region20
    $region19: #{encoder_forward.2} parent=5 // pred_region
      // Predicated region
      $region21: #{encoder_forward.2} parent=19 // pred_check
        %p178 = pneg %p45
      $region22: #{encoder_forward.2} parent=19 // pred_check_branch
        %180 = sbr.rel (%p178) target = $region24
      $region23: #{encoder_forward.2} parent=19 // pred_region
        %s181 = smul.u32 2, %s19
        %p182 = scmp.lt.s32.totalorder %s18, 1
        %s183 = scalar_select %p182, %s18, 1
        %p184 = scmp.lt.s32.totalorder %s181, 1
        %s185 = scalar_select %p184, %s181, 1
        %s186 = smul.addr %s183, 10
        %s187 = sadd.s32 %s185, %s186
        %s188 = smul.addr %s187, 4
        %s189 = scalar_lea.vmem %s0, %s188
        %s190 = smul.u32 2, %s19
      $region24: #{encoder_forward.2} parent=19 // pred_fallthru
        _
    $region20: #{encoder_forward.2} parent=5 // pred_fallthru
      _
    %p191 = scmp.le.s32.totalorder 1, %s11
    %p192 = scmp.lt.s32.totalorder %s11, 3
    %p193 = pnand %p191, %p192
    %p194 = pneg %p193
    // Predicated region
    $region25: #{encoder_forward.2} parent=5 // pred_check
      _
    $region26: #{encoder_forward.2} parent=5 // pred_check_branch
      %196 = sbr.rel (%p193) target = $region28
    $region27: #{encoder_forward.2} parent=5 // pred_region
      %s197 = ssub.s32 %s11, 1
      %s198 = smul.u32 2, %s21
      %p199 = scmp.lt.s32.totalorder %s20, 1
      %s200 = scalar_select %p199, %s20, 1
      %p201 = scmp.lt.s32.totalorder %s198, 1
      %s202 = scalar_select %p201, %s198, 1
      %s203 = smul.addr %s200, 10
      %s204 = sadd.s32 %s202, %s203
      %s205 = smul.addr %s204, 4
      %s206 = scalar_lea.vmem %s0, %s205
      %p207 = pneg %p51
      %p208 = pneg %p48
      %p209 = pneg %p72
      %p210 = pneg %p69
      %p211 = pneg %p100
      %p212 = pneg %p97
      %s213 = smul.u32 2, %s21
      %p214 = scmp.lt.s32.totalorder %s20, 1
      %s215 = scalar_select %p214, %s20, 1
      %p216 = scmp.lt.s32.totalorder %s213, 1
      %s217 = scalar_select %p216, %s213, 1
      %s218 = smul.addr %s215, 2
      %s219 = sadd.s32 %s217, %s218
      %s220 = smul.addr %s219, 4
      %s221 = scalar_lea.vmem %s2, %s220
      %p222 = pneg %p128
      %p223 = pneg %p125
      %p224 = scmp.lt.s32.totalorder %s20, 1
      %s225 = scalar_select %p224, %s20, 1
      %p226 = scmp.lt.s32.totalorder %s21, 0
      %s227 = scalar_select %p226, %s21, 0
      %s228 = sadd.s32 %s227, %s225
      %s229 = smul.addr %s228, 8
      %s230 = scalar_lea.vmem %s3, %s229
      %p231 = pneg %p156
      %p232 = pneg %p153
      %p233 = scmp.lt.s32.totalorder %s20, 1
      %s234 = scalar_select %p233, %s20, 1
      %p235 = scmp.lt.s32.totalorder %s21, 0
      %s236 = scalar_select %p235, %s21, 0
      %s237 = sadd.s32 %s236, %s234
      %s238 = smul.addr %s237, 8
      %s239 = scalar_lea.vmem %s4, %s238
      %s240 = smul.u32 2, %s21
      %p241 = scmp.lt.s32.totalorder %s20, 1
      %s242 = scalar_select %p241, %s20, 1
      %p243 = scmp.lt.s32.totalorder %s240, 1
      %s244 = scalar_select %p243, %s240, 1
      %s245 = smul.addr %s242, 10
      %s246 = sadd.s32 %s244, %s245
      %s247 = smul.addr %s246, 4
      %s248 = scalar_lea.vmem %s0, %s247
      %s249 = smul.u32 2, %s21
      %s250 = smul.u32 2, %s21
      %p251 = scmp.lt.s32.totalorder %s20, 1
      %s252 = scalar_select %p251, %s20, 1
      %p253 = scmp.lt.s32.totalorder %s250, 1
      %s254 = scalar_select %p253, %s250, 1
      %s255 = smul.addr %s252, 2
      %s256 = sadd.s32 %s254, %s255
      %s257 = smul.addr %s256, 4
      %s258 = scalar_lea.vmem %s2, %s257
      %s259 = smul.u32 2, %s21
      %p260 = scmp.lt.s32.totalorder %s20, 1
      %s261 = scalar_select %p260, %s20, 1
      %p262 = scmp.lt.s32.totalorder %s21, 0
      %s263 = scalar_select %p262, %s21, 0
      %s264 = sadd.s32 %s263, %s261
      %s265 = smul.addr %s264, 8
      %s266 = scalar_lea.vmem %s3, %s265
      %p267 = scmp.lt.s32.totalorder %s20, 1
      %s268 = scalar_select %p267, %s20, 1
      %p269 = scmp.lt.s32.totalorder %s21, 0
      %s270 = scalar_select %p269, %s21, 0
      %s271 = sadd.s32 %s270, %s268
      %s272 = smul.addr %s271, 8
      %s273 = scalar_lea.vmem %s4, %s272
      %v275 = vld [vmem:[%s1] sm:$0xf]
      %v276 = vld [vmem:[%s248] sm:$0xff]
      %v277 = vld [vmem:[%s248 + $0x8] sm:$0xff]
      %v278 = vld [vmem:[%s248 + $0x10] sm:$0xff]
      %v279 = vld [vmem:[%s248 + $0x18] sm:$0xff]
      %v280 = vld [vmem:[%s248 + $0x20] sm:$0x33]
      %v286 = vunpack.c.l.b16 %v276
      %v287 = vunpack.c.h.b16 %v276
      %v288 = vunpack.c.l.b16 %v277
      %v289 = vunpack.c.h.b16 %v277
      %v290 = vunpack.c.l.b16 %v278
      %v291 = vunpack.c.h.b16 %v278
      %v292 = vunpack.c.l.b16 %v279
      %v293 = vunpack.c.h.b16 %v279
      %v294 = vunpack.c.l.b16 %v280
      %v295 = vunpack.c.h.b16 %v280
      %v296 = vpack.c.b16 %v288, %v286
      %v297 = vpack.c.b16 %v289, %v287
      %v298 = vpack.c.b16 %v292, %v290
      %v299 = vpack.c.b16 %v293, %v291
      %v300 = vpack.c.b16 %v294, %v294
      %v301 = vpack.c.b16 %v295, %v295
      %vm306 = vcmask 293888
      %v308 = vsel %vm306, %v275, 0
      %vm310 = vcmask 1041408
      %v312 = vsel %vm310, %v300, 0
      %v315 = vsel %vm310, %v301, 0
      %317 = vmatpush.bf16.msra.mxu0 0
      %318 = vmatpush.bf16.msra.mxu0 0
      %319 = vmatpush.bf16.msra.mxu0 0
      %320 = vmatpush.bf16.msra.mxu0 0
      %321 = vmatpush.bf16.msra.mxu0 0
      %322 = vmatpush.bf16.msra.mxu0 %v312
      %323 = vmatpush.bf16.msra.mxu0 %v298
      %324 = vmatpush.bf16.msra.mxu0 %v296
      %325 = vmatmul.bf16.gmra.mxu0 %v308
      %v326 = vpop.f32.mrf.mxu0
      %v327 = vadd.f32 0.0, %v326
      %v328 = vpop.f32.mrf.mxu0
      %329 = vdwg.mxu0
      %330 = vmatpush.bf16.msra.mxu0 0
      %331 = vmatpush.bf16.msra.mxu0 0
      %332 = vmatpush.bf16.msra.mxu0 0
      %333 = vmatpush.bf16.msra.mxu0 0
      %334 = vmatpush.bf16.msra.mxu0 0
      %335 = vmatpush.bf16.msra.mxu0 %v315
      %336 = vmatpush.bf16.msra.mxu0 %v299
      %337 = vmatpush.bf16.msra.mxu0 %v297
      %338 = vmatmul.bf16.gmra.mxu0 %v308
      %v339 = vpop.f32.mrf.mxu0
      %v340 = vadd.f32 0.0, %v339
      %v341 = vpop.f32.mrf.mxu0
      %342 = vdwg.mxu0
      %v343 = vpack.c.bf16 %v340, %v327
      %vm344 = vcmask 1043456
      %vm345 = vcmask 556036
      %vm346 = vmor %vm345, %vm344
      %347 = vst.msk [vmem:[%s258] sm:$0xff] %vm346, %v343
      %vm348 = vcmask 556032
      %v349 = vsel %vm348, %v340, 0.0
      %v350 = vadd.f32 %v327, %v349
      %351 = vadd.xlane.f32.xlu0 %v350
      %v352 = vpop.xlane.xlu0 %351
      %vm353 = vcmask 7168
      %354 = vst.msk [vmem:[%s266] sm:$0xff] %vm353, %v352
      %v355 = vmul.f32 %v327, %v327
      %v356 = vmul.f32 %v340, %v340
      %v357 = vsel %vm348, %v356, 0.0
      %v358 = vadd.f32 %v355, %v357
      %359 = vadd.xlane.f32.xlu0 %v358
      %v360 = vpop.xlane.xlu0 %359
      %361 = vst.msk [vmem:[%s273] sm:$0xff] %vm353, %v360
      %s362 = smul.u32 2, %s21
      %p363 = scmp.lt.s32.totalorder %s20, 1
      %s364 = scalar_select %p363, %s20, 1
      %p365 = scmp.lt.s32.totalorder %s362, 1
      %s366 = scalar_select %p365, %s362, 1
      %s367 = smul.addr %s364, 2
      %s368 = sadd.s32 %s366, %s367
      %s369 = smul.addr %s368, 4
      %s370 = scalar_lea.vmem %s2, %s369
      %p371 = scmp.lt.s32.totalorder %s20, 1
      %s372 = scalar_select %p371, %s20, 1
      %p373 = scmp.lt.s32.totalorder %s21, 0
      %s374 = scalar_select %p373, %s21, 0
      %s375 = sadd.s32 %s374, %s372
      %s376 = smul.addr %s375, 8
      %s377 = scalar_lea.vmem %s3, %s376
      %p378 = scmp.lt.s32.totalorder %s20, 1
      %s379 = scalar_select %p378, %s20, 1
      %p380 = scmp.lt.s32.totalorder %s21, 0
      %s381 = scalar_select %p380, %s21, 0
      %s382 = sadd.s32 %s381, %s379
      %s383 = smul.addr %s382, 8
      %s384 = scalar_lea.vmem %s4, %s383
      // Predicated region
      $region29: #{encoder_forward.2} parent=27 // pred_check
        %p385 = pneg %p97
      $region30: #{encoder_forward.2} parent=27 // pred_check_branch
        %387 = sbr.rel (%p385) target = $region32
      $region31: #{encoder_forward.2} parent=27 // pred_region
        %s388 = smul.u32 2, %s21
      $region32: #{encoder_forward.2} parent=27 // pred_fallthru
        _
      // Predicated region
      $region33: #{encoder_forward.2} parent=27 // pred_check
        %p389 = pneg %p125
      $region34: #{encoder_forward.2} parent=27 // pred_check_branch
        %391 = sbr.rel (%p389) target = $region36
      $region35: #{encoder_forward.2} parent=27 // pred_region
        _
      $region36: #{encoder_forward.2} parent=27 // pred_fallthru
        _
      // Predicated region
      $region37: #{encoder_forward.2} parent=27 // pred_check
        %p392 = pneg %p153
      $region38: #{encoder_forward.2} parent=27 // pred_check_branch
        %394 = sbr.rel (%p392) target = $region40
      $region39: #{encoder_forward.2} parent=27 // pred_region
        _
      $region40: #{encoder_forward.2} parent=27 // pred_fallthru
        _
    $region28: #{encoder_forward.2} parent=5 // pred_fallthru
      _
    %p395 = scmp.le.s32.totalorder 2, %s11
    // Predicated region
    $region41: #{encoder_forward.2} parent=5 // pred_check
      %p396 = pneg %p395
    $region42: #{encoder_forward.2} parent=5 // pred_check_branch
      %398 = sbr.rel (%p396) target = $region44
    $region43: #{encoder_forward.2} parent=5 // pred_region
      %s399 = ssub.s32 %s11, 2
      // Predicated region
      $region45: #{encoder_forward.2} parent=43 // pred_check
        %p400 = pneg %p103
      $region46: #{encoder_forward.2} parent=43 // pred_check_branch
        %402 = sbr.rel (%p400) target = $region48
      $region47: #{encoder_forward.2} parent=43 // pred_region
        %s403 = smul.u32 2, %s23
        %p404 = scmp.lt.s32.totalorder %s22, 1
        %s405 = scalar_select %p404, %s22, 1
        %p406 = scmp.lt.s32.totalorder %s403, 1
        %s407 = scalar_select %p406, %s403, 1
        %s408 = smul.addr %s405, 2
        %s409 = sadd.s32 %s407, %s408
        %s410 = smul.addr %s409, 4
        %s411 = scalar_lea.vmem %s2, %s410
      $region48: #{encoder_forward.2} parent=43 // pred_fallthru
        _
      // Predicated region
      $region49: #{encoder_forward.2} parent=43 // pred_check
        %p412 = pneg %p131
      $region50: #{encoder_forward.2} parent=43 // pred_check_branch
        %414 = sbr.rel (%p412) target = $region52
      $region51: #{encoder_forward.2} parent=43 // pred_region
        %p415 = scmp.lt.s32.totalorder %s22, 1
        %s416 = scalar_select %p415, %s22, 1
        %p417 = scmp.lt.s32.totalorder %s23, 0
        %s418 = scalar_select %p417, %s23, 0
        %s419 = sadd.s32 %s418, %s416
        %s420 = smul.addr %s419, 8
        %s421 = scalar_lea.vmem %s3, %s420
      $region52: #{encoder_forward.2} parent=43 // pred_fallthru
        _
      // Predicated region
      $region53: #{encoder_forward.2} parent=43 // pred_check
        %p422 = pneg %p159
      $region54: #{encoder_forward.2} parent=43 // pred_check_branch
        %424 = sbr.rel (%p422) target = $region56
      $region55: #{encoder_forward.2} parent=43 // pred_region
        %p425 = scmp.lt.s32.totalorder %s22, 1
        %s426 = scalar_select %p425, %s22, 1
        %p427 = scmp.lt.s32.totalorder %s23, 0
        %s428 = scalar_select %p427, %s23, 0
        %s429 = sadd.s32 %s428, %s426
        %s430 = smul.addr %s429, 8
        %s431 = scalar_lea.vmem %s4, %s430
      $region56: #{encoder_forward.2} parent=43 // pred_fallthru
        _
    $region44: #{encoder_forward.2} parent=5 // pred_fallthru
      _
  $region6: #{encoder_forward.2} parent=0 // loop_footer
    %s15 = sadd.s32 1, %s11
  $region7: #{encoder_forward.2} parent=0 // loop_footer_branch
    %10 = sbr.rel target = $region3
  $region8: #{encoder_forward.2} parent=0 // loop_exit
    _

</llo_original>
